<compile_context>
chip_gen: v5e
topology: v5e:2x2
jax: 0.10.0
libtpu: 0.0.40
codegen_flags: <defaults>
</compile_context>

<pallas_src>
import math

import numpy as np
import jax
import jax.numpy as jnp
from jax.experimental import pallas as pl
from jax.experimental.pallas import tpu as pltpu


def _conv_tanh_pool_kernel(xc_ref, w_ref, b_ref, o_ref):
    """Fused Conv2d((k, F)) + bias + Tanh + AdaptiveAvgPool2d((1, 1)) for one
    batch element, expressed as a single im2col MXU matmul.

    xc_ref : (1, H_out, KD) VMEM  im2col rows, KD = pad128(k * C_in * F)
    w_ref  : (KD, C_out)    VMEM  pre-folded, zero-padded weights
    b_ref  : (1, C_out)     VMEM  bias
    o_ref  : (1, C_out)     VMEM  pooled output
    """
    # One MXU push/drain: (H_out, KD) @ (KD, C_out), f32 accumulation.
    acc = jnp.dot(xc_ref[0], w_ref[...], preferred_element_type=jnp.float32)
    y = jnp.tanh(acc + b_ref[...].astype(jnp.float32))          # bias + EUP tanh
    # AdaptiveAvgPool2d((1,1)): conv already collapsed W to 1, so the pool is
    # just the mean over the H_out rows (stays in registers / XLU).
    o_ref[...] = jnp.mean(y, axis=0, keepdims=True).astype(o_ref.dtype)


def fold_conv_params(w, b):
    """One-time layout plumbing (done in __init__, not per call).

    w: (C_out, C_in, k, F) -> (KD_pad, C_out) im2col-folded, zero-padded so the
    contraction dim is a multiple of 128 lanes.  b: (C_out,) -> (1, C_out).
    """
    c_out, c_in, k, f = w.shape
    d = c_in * f
    kd = k * d
    kd_pad = ((kd + 127) // 128) * 128
    # index ordering (tap, c_in, f) -> tap*D + c_in*F + f, output channels last
    # (lane axis of the matmul RHS / output).
    w2 = w.transpose(2, 1, 3, 0).reshape(kd, c_out)
    if kd_pad != kd:
        w2 = jnp.pad(w2, ((0, kd_pad - kd), (0, 0)))
    b2 = b.reshape(1, c_out)
    return w2, b2


def cnn_conv_layers_last_forward(x, w2, b2, k):
    """x: (N, C_in, H, F), w2: (KD_pad, C_out), b2: (1, C_out) -> (1, 512)."""
    n, c_in, h, f = x.shape
    kd_pad, c_out = w2.shape
    d = c_in * f
    kd = k * d
    assert kd <= kd_pad, "folded weights do not match input channel/feature dims"
    p = k // 2
    h_out = h + 2 * p - k + 1          # == h for odd k

    # Tiny (~12 KiB) im2col LHS: row = output position along H, col = flattened
    # (tap, c_in, f); zero-padded along H (conv padding) and along the
    # contraction dim (lane alignment, matches the zero rows appended to w2).
    x2 = x.transpose(0, 2, 1, 3).reshape(n, h, d)                # (N, H, D)
    xp = jnp.pad(x2, ((0, 0), (p, p), (0, 0)))                   # (N, H+2p, D)
    xc = jnp.concatenate([xp[:, i:i + h_out, :] for i in range(k)], axis=-1)
    if kd_pad != kd:
        xc = jnp.pad(xc, ((0, 0), (0, 0), (0, kd_pad - kd)))     # (N, H_out, KD_pad)

    pooled = pl.pallas_call(
        _conv_tanh_pool_kernel,
        out_shape=jax.ShapeDtypeStruct((n, c_out), x.dtype),
        grid=(n,),
        in_specs=[
            pl.BlockSpec((1, h_out, kd_pad), lambda ni: (ni, 0, 0)),   # im2col LHS
            pl.BlockSpec((kd_pad, c_out), lambda ni: (0, 0)),          # weights
            pl.BlockSpec((1, c_out), lambda ni: (0, 0)),               # bias
        ],
        out_specs=pl.BlockSpec((1, c_out), lambda ni: (ni, 0)),
        compiler_params=pltpu.CompilerParams(
            dimension_semantics=("parallel",)),
    )(xc, w2, b2)

    # The PyTorch module hardcodes x.view(1, 512).
    assert n * c_out == 512, "CNNConvLayersLast requires N * channels[-1] == 512"
    return pooled.reshape(1, 512)


class CNNConvLayersLast:
    """JAX/Pallas port of the PyTorch module (deterministic synthetic init)."""

    def __init__(self, channels, kernels, feature_dim, key):
        c_in, c_out = channels[-2], channels[-1]
        k = kernels[-1]
        self.k = k
        self.feature_dim = feature_dim
        # Conv2d default init: U(-bound, bound), bound = 1/sqrt(fan_in),
        # fan_in = in_channels * kH * kW = c_in * k * feature_dim.
        fan_in = c_in * k * feature_dim
        bound = 1.0 / math.sqrt(fan_in)
        wk, bk = jax.random.split(key)
        self.w = jax.random.uniform(wk, (c_out, c_in, k, feature_dim),
                                    jnp.float32, -bound, bound)
        self.b = jax.random.uniform(bk, (c_out,), jnp.float32, -bound, bound)
        # Hoisted, one-time weight/bias layout for the kernel.
        self.w2, self.b2 = fold_conv_params(self.w, self.b)

    def __call__(self, x):
        return cnn_conv_layers_last_forward(x, self.w2, self.b2, self.k)


def _reference_forward(x, w, b):
    """Plain-XLA reference (Conv2d + Tanh + AdaptiveAvgPool2d + view)."""
    k = w.shape[2]
    p = k // 2
    y = jax.lax.conv_general_dilated(
        x, w, window_strides=(1, 1), padding=((p, p), (0, 0)),
        dimension_numbers=("NCHW", "OIHW", "NCHW"),
        precision=jax.lax.Precision.HIGHEST)
    y = jnp.tanh(y + b[None, :, None, None])
    y = jnp.mean(y, axis=(2, 3))                 # AdaptiveAvgPool2d((1, 1))
    return y.reshape(1, 512)


if __name__ == "__main__":
    key = jax.random.PRNGKey(0)
    key, xkey, pkey = jax.random.split(key, 3)

    # Small shapes consistent with the module: the trailing view(1, 512)
    # forces batch=1 and channels[-1]=512.
    channels = [4, 512]
    kernels = [3, 3]
    feature_dim = 16
    N, C, H, W = 1, channels[-2], 16, feature_dim
    x = jax.random.normal(xkey, (N, C, H, W), dtype=jnp.float32)

    model = CNNConvLayersLast(channels, kernels, feature_dim, key=pkey)

    out = jax.block_until_ready(model(x))
    ref = jax.block_until_ready(_reference_forward(x, model.w, model.b))

    assert out.shape == (1, 512), out.shape
    np.testing.assert_allclose(np.asarray(out), np.asarray(ref),
                               rtol=1e-4, atol=1e-4)

    print("KERNEL_OK")
</pallas_src>

<mosaic_0001>
module attributes {stable_mosaic.version = 11 : i64} {
  func.func @_conv_tanh_pool_kernel(%arg0: i32, %arg1: memref<1x16x256xf32, #tpu.memory_space<vmem>>, %arg2: memref<256x512xf32, #tpu.memory_space<vmem>>, %arg3: memref<1x512xf32, #tpu.memory_space<vmem>>, %arg4: memref<1x512xf32, #tpu.memory_space<vmem>>) attributes {dimension_semantics = [#tpu.dimension_semantics<parallel>], iteration_bounds = array<i64: 1>, scalar_prefetch = 0 : i64, scratch_operands = 0 : i64, tpu.core_type = #tpu.core_type<tc>, window_params = [{transform_indices = @transform_0, window_bounds = array<i64: 1, 16, 256>}, {pipeline_mode = #tpu.pipeline_mode<synchronous>, transform_indices = @transform_1, window_bounds = array<i64: 256, 512>}, {pipeline_mode = #tpu.pipeline_mode<synchronous>, transform_indices = @transform_2, window_bounds = array<i64: 1, 512>}, {transform_indices = @transform_3, window_bounds = array<i64: 1, 512>}]} {
    %c0 = arith.constant 0 : index
    %c0_0 = arith.constant 0 : index
    %c0_1 = arith.constant 0 : index
    %0 = vector.load %arg1[%c0, %c0_0, %c0_1] : memref<1x16x256xf32, #tpu.memory_space<vmem>>, vector<1x16x256xf32>
    %1 = vector.shape_cast %0 : vector<1x16x256xf32> to vector<16x256xf32>
    %c0_2 = arith.constant 0 : index
    %c0_3 = arith.constant 0 : index
    %2 = vector.load %arg2[%c0_2, %c0_3] : memref<256x512xf32, #tpu.memory_space<vmem>>, vector<256x512xf32>
    %cst = arith.constant dense<0.000000e+00> : vector<16x512xf32>
    %3 = tpu.matmul %1, %2, %cst {dimension_numbers = #tpu.dot_dimension_numbers<[1], [0], [0], [1], [0, 0, 1, 1], [], []>} : vector<16x256xf32>, vector<256x512xf32>, vector<16x512xf32> -> vector<16x512xf32>
    %c0_4 = arith.constant 0 : index
    %c0_5 = arith.constant 0 : index
    %4 = vector.load %arg3[%c0_4, %c0_5] : memref<1x512xf32, #tpu.memory_space<vmem>>, vector<1x512xf32>
    %5 = vector.broadcast %4 : vector<1x512xf32> to vector<16x512xf32>
    %6 = arith.addf %3, %5 : vector<16x512xf32>
    %7 = math.tanh %6 : vector<16x512xf32>
    %cst_6 = arith.constant dense<0.000000e+00> : vector<512xf32>
    %8 = vector.multi_reduction <add>, %7, %cst_6 [0] : vector<16x512xf32> to vector<512xf32>
    %9 = vector.shape_cast %8 : vector<512xf32> to vector<1x512xf32>
    %cst_7 = arith.constant 1.600000e+01 : f32
    %10 = vector.broadcast %cst_7 : f32 to vector<1x512xf32>
    %11 = arith.divf %9, %10 : vector<1x512xf32>
    %c0_8 = arith.constant 0 : index
    %c0_9 = arith.constant 0 : index
    %12 = vector.load %arg4[%c0_8, %c0_9] : memref<1x512xf32, #tpu.memory_space<vmem>>, vector<1x512xf32>
    tpu.vector_store %arg4[%c0_8, %c0_9], %11 {strides = array<i32>} : memref<1x512xf32, #tpu.memory_space<vmem>>, vector<1x512xf32>,
    return
  }
  func.func @transform_0(%arg0: i32) -> (i32, i32, i32) {
    %c0_i32 = arith.constant 0 : i32
    %c0_i32_0 = arith.constant 0 : i32
    %c0_i32_1 = arith.constant 0 : i32
    return %arg0, %c0_i32, %c0_i32_0 : i32, i32, i32
  }
  func.func @transform_1(%arg0: i32) -> (i32, i32) {
    %c0_i32 = arith.constant 0 : i32
    %c0_i32_0 = arith.constant 0 : i32
    %c0_i32_1 = arith.constant 0 : i32
    return %c0_i32, %c0_i32_0 : i32, i32
  }
  func.func @transform_2(%arg0: i32) -> (i32, i32) {
    %c0_i32 = arith.constant 0 : i32
    %c0_i32_0 = arith.constant 0 : i32
    %c0_i32_1 = arith.constant 0 : i32
    return %c0_i32, %c0_i32_0 : i32, i32
  }
  func.func @transform_3(%arg0: i32) -> (i32, i32) {
    %c0_i32 = arith.constant 0 : i32
    %c0_i32_0 = arith.constant 0 : i32
    return %arg0, %c0_i32 : i32, i32
  }
}

</mosaic_0001>

<llo_original>
// kernel: tpu_custom_call.1
$region0: #{tpu_custom_call.1}
  #allocation0 [shape = 'u32[]', space=smem, size = 0x4, offset = 0x4, fixed_abs, tag = 'smem constant byte address 0x4 - core index']
  #allocation1 [shape = 'u32[72,128]{1,0:T(1,128)}', space=vmem, size = 0x9000, scoped, tag = 'internal scratch']
  %s0 = inlined_call_operand.hbm [shape: f32[1,16,256], index: 0, kind: input, shape index: {}]
  %s1 = inlined_call_operand.hbm [shape: f32[256,512], index: 1, kind: input, shape index: {}]
  %s2 = inlined_call_operand.hbm [shape: f32[1,512], index: 2, kind: input, shape index: {}]
  %s3 = inlined_call_operand.hbm [shape: f32[1,512], index: 3, kind: output, shape index: {}]
  %s4 = sld [smem:[#allocation0]]
  $region34: #{tpu_custom_call.1} parent=0
    _
  %s6 = ssub.s32 1, %s4
  %s7 = scalar_select 0, %s6, %s4
  $region1: #{tpu_custom_call.1} parent=0
    #allocation2 [shape = 'u8[16384]{0}', space=vmem, size = 0x4000, scoped, tag = 'input window, operand 0, single buffered']
    #allocation3 [shape = 's32[1]{0}', space=sflag, size = 0x4, scoped, tag = 'scoped memory for tpu_custom_call.1']
    #allocation4 [shape = 's32[1]{0}', space=sflag, size = 0x4, scoped, tag = 'scoped memory for tpu_custom_call.1']
    #allocation5 [shape = 'u8[524288]{0}', space=vmem, size = 0x80000, scoped, tag = 'input window, operand 1, single buffered']
    #allocation6 [shape = 's32[1]{0}', space=sflag, size = 0x4, scoped, tag = 'scoped memory for tpu_custom_call.1']
    #allocation7 [shape = 'u8[2048]{0}', space=vmem, size = 0x800, scoped, tag = 'input window, operand 2, single buffered']
    #allocation8 [shape = 'u8[2048]{0}', space=vmem, size = 0x800, scoped, tag = 'output window, operand 0, single buffered']
    %8 = vsyncpa [#allocation3], 0
    %9 = vsyncpa [#allocation6], 0
    %10 = vsyncpa [#allocation4], 0
    // Predicated region
    $region2: #{tpu_custom_call.1} parent=1 // pred_check
      _
    $region3: #{tpu_custom_call.1} parent=1 // pred_check_branch
      %12 = sbr.rel (0) target = $region5
    $region4: #{tpu_custom_call.1} parent=1 // pred_region
      %14 = vsyncadd [#allocation3], 0
      %s15 = sshll.u32 %s0, 4
      %s16 = int_to_ptr.hbm [resolvable:$true] %s15
      %s17 = sshll.u32 [#allocation2], 4
      %s18 = int_to_ptr.vmem [resolvable:$true] %s17
      %23 = dma.hbm_to_vmem [thread:$0]  %s16, 512, %s18, [#allocation3], 256, 256, 16
    $region5: #{tpu_custom_call.1} parent=1 // pred_fallthru
      _
    // Predicated region
    $region6: #{tpu_custom_call.1} parent=1 // pred_check
      _
    $region7: #{tpu_custom_call.1} parent=1 // pred_check_branch
      %25 = sbr.rel (0) target = $region9
    $region8: #{tpu_custom_call.1} parent=1 // pred_region
      %27 = vsyncadd [#allocation6], 0
      %s28 = sshll.u32 %s1, 4
      %s29 = int_to_ptr.hbm [resolvable:$true] %s28
      %s30 = sshll.u32 [#allocation5], 4
      %s31 = int_to_ptr.vmem [resolvable:$true] %s30
      %36 = dma.hbm_to_vmem [thread:$0]  %s29, 16384, %s31, [#allocation6], 512, 512, 32
    $region9: #{tpu_custom_call.1} parent=1 // pred_fallthru
      _
    // Predicated region
    $region10: #{tpu_custom_call.1} parent=1 // pred_check
      _
    $region11: #{tpu_custom_call.1} parent=1 // pred_check_branch
      %38 = sbr.rel (0) target = $region13
    $region12: #{tpu_custom_call.1} parent=1 // pred_region
      %40 = vsyncadd [#allocation6], 0
      %s42 = sshll.u32 %s2, 4
      %s43 = int_to_ptr.hbm [resolvable:$true] %s42
      %s44 = sshll.u32 [#allocation7], 4
      %s45 = int_to_ptr.vmem [resolvable:$true] %s44
      %47 = dma.hbm_to_vmem [thread:$0]  %s43, 64, %s45, [#allocation6]
    $region13: #{tpu_custom_call.1} parent=1 // pred_fallthru
      _
    // Predicated region
    $region14: #{tpu_custom_call.1} parent=1 // pred_check
      _
    $region15: #{tpu_custom_call.1} parent=1 // pred_check_branch
      %49 = sbr.rel (0) target = $region17
    $region16: #{tpu_custom_call.1} parent=1 // pred_region
      %51 = dma.done [#allocation3], 512
    $region17: #{tpu_custom_call.1} parent=1 // pred_fallthru
      _
    // Predicated region
    $region18: #{tpu_custom_call.1} parent=1 // pred_check
      _
    $region19: #{tpu_custom_call.1} parent=1 // pred_check_branch
      %53 = sbr.rel (0) target = $region21
    $region20: #{tpu_custom_call.1} parent=1 // pred_region
      %55 = dma.done [#allocation6], 16384
    $region21: #{tpu_custom_call.1} parent=1 // pred_fallthru
      _
    // Predicated region
    $region22: #{tpu_custom_call.1} parent=1 // pred_check
      _
    $region23: #{tpu_custom_call.1} parent=1 // pred_check_branch
      %57 = sbr.rel (0) target = $region25
    $region24: #{tpu_custom_call.1} parent=1 // pred_region
      %59 = dma.done [#allocation6], 64
    $region25: #{tpu_custom_call.1} parent=1 // pred_fallthru
      _
    %v60 = vld [vmem:[#allocation2] sm:$0xff]
    %v61 = vld [vmem:[#allocation2 + $0x8] sm:$0xff]
    %v62 = vld [vmem:[#allocation2 + $0x10] sm:$0xff]
    %v63 = vld [vmem:[#allocation2 + $0x18] sm:$0xff]
    %v64 = vld [vmem:[#allocation5] sm:$0xff]
    %v65 = vld [vmem:[#allocation5 + $0x8] sm:$0xff]
    %v66 = vld [vmem:[#allocation5 + $0x10] sm:$0xff]
    %v67 = vld [vmem:[#allocation5 + $0x18] sm:$0xff]
    %v68 = vld [vmem:[#allocation5 + $0x20] sm:$0xff]
    %v69 = vld [vmem:[#allocation5 + $0x28] sm:$0xff]
    %v70 = vld [vmem:[#allocation5 + $0x30] sm:$0xff]
    %v71 = vld [vmem:[#allocation5 + $0x38] sm:$0xff]
    %v72 = vld [vmem:[#allocation5 + $0x40] sm:$0xff]
    %v73 = vld [vmem:[#allocation5 + $0x48] sm:$0xff]
    %v74 = vld [vmem:[#allocation5 + $0x50] sm:$0xff]
    %v75 = vld [vmem:[#allocation5 + $0x58] sm:$0xff]
    %v76 = vld [vmem:[#allocation5 + $0x60] sm:$0xff]
    %v77 = vld [vmem:[#allocation5 + $0x68] sm:$0xff]
    %v78 = vld [vmem:[#allocation5 + $0x70] sm:$0xff]
    %v79 = vld [vmem:[#allocation5 + $0x78] sm:$0xff]
    %v80 = vld [vmem:[#allocation5 + $0x80] sm:$0xff]
    %v81 = vld [vmem:[#allocation5 + $0x88] sm:$0xff]
    %v82 = vld [vmem:[#allocation5 + $0x90] sm:$0xff]
    %v83 = vld [vmem:[#allocation5 + $0x98] sm:$0xff]
    %v84 = vld [vmem:[#allocation5 + $0xa0] sm:$0xff]
    %v85 = vld [vmem:[#allocation5 + $0xa8] sm:$0xff]
    %v86 = vld [vmem:[#allocation5 + $0xb0] sm:$0xff]
    %v87 = vld [vmem:[#allocation5 + $0xb8] sm:$0xff]
    %v88 = vld [vmem:[#allocation5 + $0xc0] sm:$0xff]
    %v89 = vld [vmem:[#allocation5 + $0xc8] sm:$0xff]
    %v90 = vld [vmem:[#allocation5 + $0xd0] sm:$0xff]
    %v91 = vld [vmem:[#allocation5 + $0xd8] sm:$0xff]
    %v92 = vld [vmem:[#allocation5 + $0xe0] sm:$0xff]
    %v93 = vld [vmem:[#allocation5 + $0xe8] sm:$0xff]
    %v94 = vld [vmem:[#allocation5 + $0xf0] sm:$0xff]
    %v95 = vld [vmem:[#allocation5 + $0xf8] sm:$0xff]
    %v96 = vld [vmem:[#allocation5 + $0x100] sm:$0xff]
    %v97 = vld [vmem:[#allocation5 + $0x108] sm:$0xff]
    %v98 = vld [vmem:[#allocation5 + $0x110] sm:$0xff]
    %v99 = vld [vmem:[#allocation5 + $0x118] sm:$0xff]
    %v100 = vld [vmem:[#allocation5 + $0x120] sm:$0xff]
    %v101 = vld [vmem:[#allocation5 + $0x128] sm:$0xff]
    %v102 = vld [vmem:[#allocation5 + $0x130] sm:$0xff]
    %v103 = vld [vmem:[#allocation5 + $0x138] sm:$0xff]
    %v104 = vld [vmem:[#allocation5 + $0x140] sm:$0xff]
    %v105 = vld [vmem:[#allocation5 + $0x148] sm:$0xff]
    %v106 = vld [vmem:[#allocation5 + $0x150] sm:$0xff]
    %v107 = vld [vmem:[#allocation5 + $0x158] sm:$0xff]
    %v108 = vld [vmem:[#allocation5 + $0x160] sm:$0xff]
    %v109 = vld [vmem:[#allocation5 + $0x168] sm:$0xff]
    %v110 = vld [vmem:[#allocation5 + $0x170] sm:$0xff]
    %v111 = vld [vmem:[#allocation5 + $0x178] sm:$0xff]
    %v112 = vld [vmem:[#allocation5 + $0x180] sm:$0xff]
    %v113 = vld [vmem:[#allocation5 + $0x188] sm:$0xff]
    %v114 = vld [vmem:[#allocation5 + $0x190] sm:$0xff]
    %v115 = vld [vmem:[#allocation5 + $0x198] sm:$0xff]
    %v116 = vld [vmem:[#allocation5 + $0x1a0] sm:$0xff]
    %v117 = vld [vmem:[#allocation5 + $0x1a8] sm:$0xff]
    %v118 = vld [vmem:[#allocation5 + $0x1b0] sm:$0xff]
    %v119 = vld [vmem:[#allocation5 + $0x1b8] sm:$0xff]
    %v120 = vld [vmem:[#allocation5 + $0x1c0] sm:$0xff]
    %v121 = vld [vmem:[#allocation5 + $0x1c8] sm:$0xff]
    %v122 = vld [vmem:[#allocation5 + $0x1d0] sm:$0xff]
    %v123 = vld [vmem:[#allocation5 + $0x1d8] sm:$0xff]
    %v124 = vld [vmem:[#allocation5 + $0x1e0] sm:$0xff]
    %v125 = vld [vmem:[#allocation5 + $0x1e8] sm:$0xff]
    %v126 = vld [vmem:[#allocation5 + $0x1f0] sm:$0xff]
    %v127 = vld [vmem:[#allocation5 + $0x1f8] sm:$0xff]
    %v128 = vld [vmem:[#allocation5 + $0x200] sm:$0xff]
    %v129 = vld [vmem:[#allocation5 + $0x208] sm:$0xff]
    %v130 = vld [vmem:[#allocation5 + $0x210] sm:$0xff]
    %v131 = vld [vmem:[#allocation5 + $0x218] sm:$0xff]
    %v132 = vld [vmem:[#allocation5 + $0x220] sm:$0xff]
    %v133 = vld [vmem:[#allocation5 + $0x228] sm:$0xff]
    %v134 = vld [vmem:[#allocation5 + $0x230] sm:$0xff]
    %v135 = vld [vmem:[#allocation5 + $0x238] sm:$0xff]
    %v136 = vld [vmem:[#allocation5 + $0x240] sm:$0xff]
    %v137 = vld [vmem:[#allocation5 + $0x248] sm:$0xff]
    %v138 = vld [vmem:[#allocation5 + $0x250] sm:$0xff]
    %v139 = vld [vmem:[#allocation5 + $0x258] sm:$0xff]
    %v140 = vld [vmem:[#allocation5 + $0x260] sm:$0xff]
    %v141 = vld [vmem:[#allocation5 + $0x268] sm:$0xff]
    %v142 = vld [vmem:[#allocation5 + $0x270] sm:$0xff]
    %v143 = vld [vmem:[#allocation5 + $0x278] sm:$0xff]
    %v144 = vld [vmem:[#allocation5 + $0x280] sm:$0xff]
    %v145 = vld [vmem:[#allocation5 + $0x288] sm:$0xff]
    %v146 = vld [vmem:[#allocation5 + $0x290] sm:$0xff]
    %v147 = vld [vmem:[#allocation5 + $0x298] sm:$0xff]
    %v148 = vld [vmem:[#allocation5 + $0x2a0] sm:$0xff]
    %v149 = vld [vmem:[#allocation5 + $0x2a8] sm:$0xff]
    %v150 = vld [vmem:[#allocation5 + $0x2b0] sm:$0xff]
    %v151 = vld [vmem:[#allocation5 + $0x2b8] sm:$0xff]
    %v152 = vld [vmem:[#allocation5 + $0x2c0] sm:$0xff]
    %v153 = vld [vmem:[#allocation5 + $0x2c8] sm:$0xff]
    %v154 = vld [vmem:[#allocation5 + $0x2d0] sm:$0xff]
    %v155 = vld [vmem:[#allocation5 + $0x2d8] sm:$0xff]
    %v156 = vld [vmem:[#allocation5 + $0x2e0] sm:$0xff]
    %v157 = vld [vmem:[#allocation5 + $0x2e8] sm:$0xff]
    %v158 = vld [vmem:[#allocation5 + $0x2f0] sm:$0xff]
    %v159 = vld [vmem:[#allocation5 + $0x2f8] sm:$0xff]
    %v160 = vld [vmem:[#allocation5 + $0x300] sm:$0xff]
    %v161 = vld [vmem:[#allocation5 + $0x308] sm:$0xff]
    %v162 = vld [vmem:[#allocation5 + $0x310] sm:$0xff]
    %v163 = vld [vmem:[#allocation5 + $0x318] sm:$0xff]
    %v164 = vld [vmem:[#allocation5 + $0x320] sm:$0xff]
    %v165 = vld [vmem:[#allocation5 + $0x328] sm:$0xff]
    %v166 = vld [vmem:[#allocation5 + $0x330] sm:$0xff]
    %v167 = vld [vmem:[#allocation5 + $0x338] sm:$0xff]
    %v168 = vld [vmem:[#allocation5 + $0x340] sm:$0xff]
    %v169 = vld [vmem:[#allocation5 + $0x348] sm:$0xff]
    %v170 = vld [vmem:[#allocation5 + $0x350] sm:$0xff]
    %v171 = vld [vmem:[#allocation5 + $0x358] sm:$0xff]
    %v172 = vld [vmem:[#allocation5 + $0x360] sm:$0xff]
    %v173 = vld [vmem:[#allocation5 + $0x368] sm:$0xff]
    %v174 = vld [vmem:[#allocation5 + $0x370] sm:$0xff]
    %v175 = vld [vmem:[#allocation5 + $0x378] sm:$0xff]
    %v176 = vld [vmem:[#allocation5 + $0x380] sm:$0xff]
    %v177 = vld [vmem:[#allocation5 + $0x388] sm:$0xff]
    %v178 = vld [vmem:[#allocation5 + $0x390] sm:$0xff]
    %v179 = vld [vmem:[#allocation5 + $0x398] sm:$0xff]
    %v180 = vld [vmem:[#allocation5 + $0x3a0] sm:$0xff]
    %v181 = vld [vmem:[#allocation5 + $0x3a8] sm:$0xff]
    %v182 = vld [vmem:[#allocation5 + $0x3b0] sm:$0xff]
    %v183 = vld [vmem:[#allocation5 + $0x3b8] sm:$0xff]
    %v184 = vld [vmem:[#allocation5 + $0x3c0] sm:$0xff]
    %v185 = vld [vmem:[#allocation5 + $0x3c8] sm:$0xff]
    %v186 = vld [vmem:[#allocation5 + $0x3d0] sm:$0xff]
    %v187 = vld [vmem:[#allocation5 + $0x3d8] sm:$0xff]
    %v188 = vld [vmem:[#allocation5 + $0x3e0] sm:$0xff]
    %v189 = vld [vmem:[#allocation5 + $0x3e8] sm:$0xff]
    %v190 = vld [vmem:[#allocation5 + $0x3f0] sm:$0xff]
    %v191 = vld [vmem:[#allocation5 + $0x3f8] sm:$0xff]
    %v192 = vld [vmem:[#allocation7] sm:$0xf]
    %v194 = vperm.slane %v192, 0
    %v195 = vperm.slane %v192, 1
    %v196 = vperm.slane %v192, 2
    %v197 = vperm.slane %v192, 3
    %202 = vmatpush.msra.mxu0 %v124
    %203 = vmatpush.msra.mxu0 %v120
    %204 = vmatpush.msra.mxu0 %v116
    %205 = vmatpush.msra.mxu0 %v112
    %206 = vmatpush.msra.mxu0 %v108
    %207 = vmatpush.msra.mxu0 %v104
    %208 = vmatpush.msra.mxu0 %v100
    %209 = vmatpush.msra.mxu0 %v96
    %210 = vmatpush.msra.mxu0 %v92
    %211 = vmatpush.msra.mxu0 %v88
    %212 = vmatpush.msra.mxu0 %v84
    %213 = vmatpush.msra.mxu0 %v80
    %214 = vmatpush.msra.mxu0 %v76
    %215 = vmatpush.msra.mxu0 %v72
    %216 = vmatpush.msra.mxu0 %v68
    %217 = vmatpush.msra.mxu0 %v64
    %218 = vmatmul.f32.gmra.mxu0 %v60
    %v219 = vpop.f32.mrf.mxu0
    %v220 = vadd.f32 %v194, %v219
    %221 = vmatmul.f32.gmra.mxu0 %v62
    %v222 = vpop.f32.mrf.mxu0
    %v223 = vadd.f32 %v194, %v222
    %224 = vdwg.mxu0
    %225 = vmatpush.msra.mxu0 %v188
    %226 = vmatpush.msra.mxu0 %v184
    %227 = vmatpush.msra.mxu0 %v180
    %228 = vmatpush.msra.mxu0 %v176
    %229 = vmatpush.msra.mxu0 %v172
    %230 = vmatpush.msra.mxu0 %v168
    %231 = vmatpush.msra.mxu0 %v164
    %232 = vmatpush.msra.mxu0 %v160
    %233 = vmatpush.msra.mxu0 %v156
    %234 = vmatpush.msra.mxu0 %v152
    %235 = vmatpush.msra.mxu0 %v148
    %236 = vmatpush.msra.mxu0 %v144
    %237 = vmatpush.msra.mxu0 %v140
    %238 = vmatpush.msra.mxu0 %v136
    %239 = vmatpush.msra.mxu0 %v132
    %240 = vmatpush.msra.mxu0 %v128
    %241 = vmatmul.f32.gmra.mxu0 %v61
    %v242 = vpop.f32.mrf.mxu0
    %v243 = vadd.f32 %v220, %v242
    %244 = vmatmul.f32.gmra.mxu0 %v63
    %v245 = vpop.f32.mrf.mxu0
    %v246 = vadd.f32 %v223, %v245
    %247 = vdwg.mxu0
    %248 = vmatpush.msra.mxu0 %v125
    %249 = vmatpush.msra.mxu0 %v121
    %250 = vmatpush.msra.mxu0 %v117
    %251 = vmatpush.msra.mxu0 %v113
    %252 = vmatpush.msra.mxu0 %v109
    %253 = vmatpush.msra.mxu0 %v105
    %254 = vmatpush.msra.mxu0 %v101
    %255 = vmatpush.msra.mxu0 %v97
    %256 = vmatpush.msra.mxu0 %v93
    %257 = vmatpush.msra.mxu0 %v89
    %258 = vmatpush.msra.mxu0 %v85
    %259 = vmatpush.msra.mxu0 %v81
    %260 = vmatpush.msra.mxu0 %v77
    %261 = vmatpush.msra.mxu0 %v73
    %262 = vmatpush.msra.mxu0 %v69
    %263 = vmatpush.msra.mxu0 %v65
    %264 = vmatmul.f32.gmra.mxu0 %v60
    %v265 = vpop.f32.mrf.mxu0
    %v266 = vadd.f32 %v195, %v265
    %267 = vmatmul.f32.gmra.mxu0 %v62
    %v268 = vpop.f32.mrf.mxu0
    %v269 = vadd.f32 %v195, %v268
    %270 = vdwg.mxu0
    %271 = vmatpush.msra.mxu0 %v189
    %272 = vmatpush.msra.mxu0 %v185
    %273 = vmatpush.msra.mxu0 %v181
    %274 = vmatpush.msra.mxu0 %v177
    %275 = vmatpush.msra.mxu0 %v173
    %276 = vmatpush.msra.mxu0 %v169
    %277 = vmatpush.msra.mxu0 %v165
    %278 = vmatpush.msra.mxu0 %v161
    %279 = vmatpush.msra.mxu0 %v157
    %280 = vmatpush.msra.mxu0 %v153
    %281 = vmatpush.msra.mxu0 %v149
    %282 = vmatpush.msra.mxu0 %v145
    %283 = vmatpush.msra.mxu0 %v141
    %284 = vmatpush.msra.mxu0 %v137
    %285 = vmatpush.msra.mxu0 %v133
    %286 = vmatpush.msra.mxu0 %v129
    %287 = vmatmul.f32.gmra.mxu0 %v61
    %v288 = vpop.f32.mrf.mxu0
    %v289 = vadd.f32 %v266, %v288
    %290 = vmatmul.f32.gmra.mxu0 %v63
    %v291 = vpop.f32.mrf.mxu0
    %v292 = vadd.f32 %v269, %v291
    %293 = vdwg.mxu0
    %294 = vmatpush.msra.mxu0 %v126
    %295 = vmatpush.msra.mxu0 %v122
    %296 = vmatpush.msra.mxu0 %v118
    %297 = vmatpush.msra.mxu0 %v114
    %298 = vmatpush.msra.mxu0 %v110
    %299 = vmatpush.msra.mxu0 %v106
    %300 = vmatpush.msra.mxu0 %v102
    %301 = vmatpush.msra.mxu0 %v98
    %302 = vmatpush.msra.mxu0 %v94
    %303 = vmatpush.msra.mxu0 %v90
    %304 = vmatpush.msra.mxu0 %v86
    %305 = vmatpush.msra.mxu0 %v82
    %306 = vmatpush.msra.mxu0 %v78
    %307 = vmatpush.msra.mxu0 %v74
    %308 = vmatpush.msra.mxu0 %v70
    %309 = vmatpush.msra.mxu0 %v66
    %310 = vmatmul.f32.gmra.mxu0 %v60
    %v311 = vpop.f32.mrf.mxu0
    %v312 = vadd.f32 %v196, %v311
    %313 = vmatmul.f32.gmra.mxu0 %v62
    %v314 = vpop.f32.mrf.mxu0
    %v315 = vadd.f32 %v196, %v314
    %316 = vdwg.mxu0
    %317 = vmatpush.msra.mxu0 %v190
    %318 = vmatpush.msra.mxu0 %v186
    %319 = vmatpush.msra.mxu0 %v182
    %320 = vmatpush.msra.mxu0 %v178
    %321 = vmatpush.msra.mxu0 %v174
    %322 = vmatpush.msra.mxu0 %v170
    %323 = vmatpush.msra.mxu0 %v166
    %324 = vmatpush.msra.mxu0 %v162
    %325 = vmatpush.msra.mxu0 %v158
    %326 = vmatpush.msra.mxu0 %v154
    %327 = vmatpush.msra.mxu0 %v150
    %328 = vmatpush.msra.mxu0 %v146
    %329 = vmatpush.msra.mxu0 %v142
    %330 = vmatpush.msra.mxu0 %v138
    %331 = vmatpush.msra.mxu0 %v134
    %332 = vmatpush.msra.mxu0 %v130
    %333 = vmatmul.f32.gmra.mxu0 %v61
    %v334 = vpop.f32.mrf.mxu0
    %v335 = vadd.f32 %v312, %v334
    %336 = vmatmul.f32.gmra.mxu0 %v63
    %v337 = vpop.f32.mrf.mxu0
    %v338 = vadd.f32 %v315, %v337
    %339 = vdwg.mxu0
    %340 = vmatpush.msra.mxu0 %v127
    %341 = vmatpush.msra.mxu0 %v123
    %342 = vmatpush.msra.mxu0 %v119
    %343 = vmatpush.msra.mxu0 %v115
    %344 = vmatpush.msra.mxu0 %v111
    %345 = vmatpush.msra.mxu0 %v107
    %346 = vmatpush.msra.mxu0 %v103
    %347 = vmatpush.msra.mxu0 %v99
    %348 = vmatpush.msra.mxu0 %v95
    %349 = vmatpush.msra.mxu0 %v91
    %350 = vmatpush.msra.mxu0 %v87
    %351 = vmatpush.msra.mxu0 %v83
    %352 = vmatpush.msra.mxu0 %v79
    %353 = vmatpush.msra.mxu0 %v75
    %354 = vmatpush.msra.mxu0 %v71
    %355 = vmatpush.msra.mxu0 %v67
    %356 = vmatmul.f32.gmra.mxu0 %v60
    %v357 = vpop.f32.mrf.mxu0
    %v358 = vadd.f32 %v197, %v357
    %359 = vmatmul.f32.gmra.mxu0 %v62
    %v360 = vpop.f32.mrf.mxu0
    %v361 = vadd.f32 %v197, %v360
    %362 = vdwg.mxu0
    %363 = vmatpush.msra.mxu0 %v191
    %364 = vmatpush.msra.mxu0 %v187
    %365 = vmatpush.msra.mxu0 %v183
    %366 = vmatpush.msra.mxu0 %v179
    %367 = vmatpush.msra.mxu0 %v175
    %368 = vmatpush.msra.mxu0 %v171
    %369 = vmatpush.msra.mxu0 %v167
    %370 = vmatpush.msra.mxu0 %v163
    %371 = vmatpush.msra.mxu0 %v159
    %372 = vmatpush.msra.mxu0 %v155
    %373 = vmatpush.msra.mxu0 %v151
    %374 = vmatpush.msra.mxu0 %v147
    %375 = vmatpush.msra.mxu0 %v143
    %376 = vmatpush.msra.mxu0 %v139
    %377 = vmatpush.msra.mxu0 %v135
    %378 = vmatpush.msra.mxu0 %v131
    %379 = vmatmul.f32.gmra.mxu0 %v61
    %v380 = vpop.f32.mrf.mxu0
    %v381 = vadd.f32 %v358, %v380
    %382 = vmatmul.f32.gmra.mxu0 %v63
    %v383 = vpop.f32.mrf.mxu0
    %v384 = vadd.f32 %v361, %v383
    %385 = vdwg.mxu0
    %v386 = vtanh.pop %v243
    %v387 = vtanh.pop %v289
    %v388 = vtanh.pop %v335
    %v389 = vtanh.pop %v381
    %v390 = vtanh.pop %v246
    %v391 = vtanh.pop %v292
    %v392 = vtanh.pop %v338
    %v393 = vtanh.pop %v384
    %v394 = vadd.f32 %v386, %v390
    %v395 = vrot.slane %v394, 4
    %v396 = vadd.f32 %v394, %v395
    %v397 = vrot.slane %v396, 2
    %v398 = vadd.f32 %v396, %v397
    %v399 = vrot.slane %v398, 1
    %v400 = vadd.f32 %v398, %v399
    %v401 = vadd.f32 %v387, %v391
    %v402 = vrot.slane %v401, 4
    %v403 = vadd.f32 %v401, %v402
    %v404 = vrot.slane %v403, 2
    %v405 = vadd.f32 %v403, %v404
    %v406 = vrot.slane %v405, 1
    %v407 = vadd.f32 %v405, %v406
    %v408 = vadd.f32 %v388, %v392
    %v409 = vrot.slane %v408, 4
    %v410 = vadd.f32 %v408, %v409
    %v411 = vrot.slane %v410, 2
    %v412 = vadd.f32 %v410, %v411
    %v413 = vrot.slane %v412, 1
    %v414 = vadd.f32 %v412, %v413
    %v415 = vadd.f32 %v389, %v393
    %v416 = vrot.slane %v415, 4
    %v417 = vadd.f32 %v415, %v416
    %v418 = vrot.slane %v417, 2
    %v419 = vadd.f32 %v417, %v418
    %v420 = vrot.slane %v419, 1
    %v421 = vadd.f32 %v419, %v420
    %v422 = vrcp.pop 16.0
    %v423 = vmul.f32 16.0, %v422
    %v424 = vsub.f32 1.0, %v423
    %v425 = vmul.f32 %v422, %v424
    %v426 = vadd.f32 %v422, %v425
    %vm427 = vweird.f32 %v422
    %v428 = vsel %vm427, %v422, %v426
    %v429 = vmul.f32 %v400, %v428
    %v430 = vmul.f32 %v407, %v428
    %v431 = vmul.f32 %v414, %v428
    %v432 = vmul.f32 %v421, %v428
    %v437 = vrot.slane %v430, 7
    %v438 = vrot.slane %v431, 6
    %v439 = vrot.slane %v432, 5
    %vm440 = vcmask 1040384
    %v441 = vsel %vm440, %v429, %v437
    %vm442 = vcmask 1042434
    %v443 = vsel %vm442, %v438, %v439
    %vm444 = vcmask 1041408
    %v445 = vsel %vm444, %v441, %v443
    %v447 = vlaneseq
    %vm448 = vcmp.ge.s32.totalorder %v447, 0
    %vm449 = vcmp.lt.s32.totalorder %v447, 512
    %vm450 = vmand %vm448, %vm449
    %451 = vst.msk [vmem:[#allocation8] sm:$0xf] %vm450, %v445
    // Predicated region
    $region26: #{tpu_custom_call.1} parent=1 // pred_check
      _
    $region27: #{tpu_custom_call.1} parent=1 // pred_check_branch
      %453 = sbr.rel (0) target = $region29
    $region28: #{tpu_custom_call.1} parent=1 // pred_region
      %455 = vsyncadd [#allocation4], 0
      %s457 = sshll.u32 [#allocation8], 4
      %s458 = int_to_ptr.vmem [resolvable:$true] %s457
      %s459 = sshll.u32 %s3, 4
      %s460 = int_to_ptr.hbm [resolvable:$true] %s459
      %462 = dma.vmem_to_hbm [thread:$0]  %s458, 64, %s460, [#allocation4]
    $region29: #{tpu_custom_call.1} parent=1 // pred_fallthru
      _
    // Predicated region
    $region30: #{tpu_custom_call.1} parent=1 // pred_check
      _
    $region31: #{tpu_custom_call.1} parent=1 // pred_check_branch
      %464 = sbr.rel (0) target = $region33
    $region32: #{tpu_custom_call.1} parent=1 // pred_region
      %466 = dma.done [#allocation4], 64
    $region33: #{tpu_custom_call.1} parent=1 // pred_fallthru
      _
    %467 = vsyncpa [#allocation3], 1
    %468 = vsyncpa [#allocation6], 1
    %469 = vsyncpa [#allocation4], 1

</llo_original>
